<compile_context>
chip_gen: v5e
topology: v5e:2x2
jax: 0.10.0
libtpu: 0.0.40
codegen_flags: <defaults>
</compile_context>

<pallas_src>
import jax
import jax.numpy as jnp
from jax.experimental import pallas as pl
from jax.experimental.pallas import tpu as pltpu


def _decoder_kernel(z1_ref, z2_ref, w1_ref, w2_ref, b_ref, o_ref):
    # Two tiny-K MXU matmuls accumulated in f32; bias add folded into the store.
    acc = jnp.dot(z1_ref[...], w1_ref[...], preferred_element_type=jnp.float32)
    acc = acc + jnp.dot(z2_ref[...], w2_ref[...], preferred_element_type=jnp.float32)
    o_ref[...] = (acc + b_ref[...]).astype(o_ref.dtype)


def prepare_decoder_params(w1, b1, w2, b2):
    """One-time preprocessing (hoisted out of the per-call hot path).

    PyTorch nn.Linear stores weight as [out, in]; we transpose once and
    pre-sum the two biases.
      w1: [O, L1], b1: [O], w2: [O, L2], b2: [O]
    Returns w1_t: [L1, O], w2_t: [L2, O], b: [1, O].
    """
    w1_t = jnp.asarray(w1).T
    w2_t = jnp.asarray(w2).T
    b = (jnp.asarray(b1) + jnp.asarray(b2)).reshape(1, -1)
    return w1_t, w2_t, b


def _round_up(x, m):
    return ((x + m - 1) // m) * m


def decoder_forward(z1, z2, w1_t, w2_t, b, *, out_dtype=None):
    """Compute fc1(z1) + fc2(z2) with a fused Pallas kernel.

      z1: [B, L1]  z2: [B, L2]  w1_t: [L1, O]  w2_t: [L2, O]  b: [1, O]
    Returns [B, O].
    """
    B, L1 = z1.shape
    B2, L2 = z2.shape
    assert B == B2, "z1/z2 batch mismatch"
    O = w1_t.shape[1]
    out_dtype = out_dtype if out_dtype is not None else z1.dtype

    isz = jnp.dtype(z1.dtype).itemsize
    osz = jnp.dtype(out_dtype).itemsize
    K = L1 + L2

    bytes_resident = B * K * isz + K * O * isz + O * isz + B * O * osz
    out_shape = jax.ShapeDtypeStruct((B, O), out_dtype)

    # ---------------- (a) tiny path: single VMEM-resident block -------------
    if bytes_resident <= (8 << 20):
        vmem_spec = pl.BlockSpec(memory_space=pltpu.MemorySpace.VMEM)
        return pl.pallas_call(
            _decoder_kernel,
            out_shape=out_shape,
            in_specs=[vmem_spec] * 5,
            out_specs=vmem_spec,
            compiler_params=pltpu.CompilerParams(vmem_limit_bytes=24 << 20),
        )(z1, z2, w1_t, w2_t, b)

    tB = min(512, _round_up(B, 8))

    # ---------------- (b) moderate O: 1-D grid over batch -------------------
    # Weights + bias stay fully VMEM-resident; output stores are full-O
    # lane-dense slabs; no weight re-DMA across batch steps.
    resident_w = (K * O + O) * isz
    per_step = tB * K * isz + tB * O * osz
    vmem_est = 2 * per_step + 2 * resident_w
    if vmem_est <= (28 << 20):
        grid = (pl.cdiv(B, tB),)
        return pl.pallas_call(
            _decoder_kernel,
            out_shape=out_shape,
            grid=grid,
            in_specs=[
                pl.BlockSpec((tB, L1), lambda i: (i, 0)),
                pl.BlockSpec((tB, L2), lambda i: (i, 0)),
                pl.BlockSpec((L1, O), lambda i: (0, 0)),
                pl.BlockSpec((L2, O), lambda i: (0, 0)),
                pl.BlockSpec((1, O), lambda i: (0, 0)),
            ],
            out_specs=pl.BlockSpec((tB, O), lambda i: (i, 0)),
            compiler_params=pltpu.CompilerParams(
                dimension_semantics=("parallel",),
                vmem_limit_bytes=min(40 << 20, max(16 << 20, vmem_est + (4 << 20))),
            ),
        )(z1, z2, w1_t, w2_t, b)

    # ---------------- (c) wide O: 2-D tiled grid -----------------------------
    # Big, lane-dense output tiles so per-step DMA time dominates the fixed
    # ~0.35 us grid-step overhead; cdiv grid masks partial edge tiles.
    tO = 2048 if O >= 4096 else 1024
    tO = min(tO, _round_up(O, 128))
    grid = (pl.cdiv(B, tB), pl.cdiv(O, tO))
    per_step = 2 * (tB * K * isz + K * tO * isz + tO * isz + tB * tO * osz)
    return pl.pallas_call(
        _decoder_kernel,
        out_shape=out_shape,
        grid=grid,
        in_specs=[
            pl.BlockSpec((tB, L1), lambda i, j: (i, 0)),
            pl.BlockSpec((tB, L2), lambda i, j: (i, 0)),
            pl.BlockSpec((L1, tO), lambda i, j: (0, j)),
            pl.BlockSpec((L2, tO), lambda i, j: (0, j)),
            pl.BlockSpec((1, tO), lambda i, j: (0, j)),
        ],
        out_specs=pl.BlockSpec((tB, tO), lambda i, j: (i, j)),
        compiler_params=pltpu.CompilerParams(
            dimension_semantics=("parallel", "parallel"),
            vmem_limit_bytes=min(40 << 20, max(16 << 20, per_step + (4 << 20))),
        ),
    )(z1, z2, w1_t, w2_t, b)


def init_decoder_params(key, latent_dim1, latent_dim2, output_dim):
    """Deterministic synthetic parameters matching nn.Linear shapes/init."""
    k1, k2, k3, k4 = jax.random.split(key, 4)
    lim1 = 1.0 / jnp.sqrt(latent_dim1)
    lim2 = 1.0 / jnp.sqrt(latent_dim2)
    w1 = jax.random.uniform(k1, (output_dim, latent_dim1), jnp.float32, -lim1, lim1)
    b1 = jax.random.uniform(k2, (output_dim,), jnp.float32, -lim1, lim1)
    w2 = jax.random.uniform(k3, (output_dim, latent_dim2), jnp.float32, -lim2, lim2)
    b2 = jax.random.uniform(k4, (output_dim,), jnp.float32, -lim2, lim2)
    return w1, b1, w2, b2


if __name__ == "__main__":
    key = jax.random.PRNGKey(0)

    # ---- small shapes consistent with the module's forward (tiny path) ----
    B, latent_dim1, latent_dim2, output_dim = 8, 32, 16, 128
    kz1, kz2, kp = jax.random.split(key, 3)
    z1 = jax.random.normal(kz1, (B, latent_dim1), jnp.float32)
    z2 = jax.random.normal(kz2, (B, latent_dim2), jnp.float32)
    w1, b1, w2, b2 = init_decoder_params(kp, latent_dim1, latent_dim2, output_dim)

    w1_t, w2_t, bsum = prepare_decoder_params(w1, b1, w2, b2)  # one-time prep
    out = decoder_forward(z1, z2, w1_t, w2_t, bsum)
    out = jax.block_until_ready(out)

    ref = z1 @ w1.T + b1 + z2 @ w2.T + b2
    assert out.shape == (B, output_dim)
    assert jnp.allclose(out, ref, atol=1e-5, rtol=1e-5)

    # ---- secondary check: tiled path with a non-divisible batch edge ------
    Bl, Ol = 2000, 2048
    kz1l, kz2l, kpl = jax.random.split(jax.random.PRNGKey(1), 3)
    z1l = jax.random.normal(kz1l, (Bl, latent_dim1), jnp.float32)
    z2l = jax.random.normal(kz2l, (Bl, latent_dim2), jnp.float32)
    w1l, b1l, w2l, b2l = init_decoder_params(kpl, latent_dim1, latent_dim2, Ol)
    w1l_t, w2l_t, bl = prepare_decoder_params(w1l, b1l, w2l, b2l)
    outl = jax.block_until_ready(decoder_forward(z1l, z2l, w1l_t, w2l_t, bl))
    refl = z1l @ w1l.T + b1l + z2l @ w2l.T + b2l
    assert outl.shape == (Bl, Ol)
    assert jnp.allclose(outl, refl, atol=1e-4, rtol=1e-4)

    print("KERNEL_OK")
</pallas_src>

<mosaic_0001>
module attributes {stable_mosaic.version = 11 : i64} {
  func.func @_decoder_kernel(%arg0: memref<8x32xf32, #tpu.memory_space<vmem>>, %arg1: memref<8x16xf32, #tpu.memory_space<vmem>>, %arg2: memref<32x128xf32, #tpu.memory_space<vmem>>, %arg3: memref<16x128xf32, #tpu.memory_space<vmem>>, %arg4: memref<1x128xf32, #tpu.memory_space<vmem>>, %arg5: memref<8x128xf32, #tpu.memory_space<vmem>>) attributes {dimension_semantics = [], scalar_prefetch = 0 : i64, scratch_operands = 0 : i64, tpu.core_type = #tpu.core_type<tc>} {
    %c0 = arith.constant 0 : index
    %c0_0 = arith.constant 0 : index
    %0 = vector.load %arg0[%c0, %c0_0] : memref<8x32xf32, #tpu.memory_space<vmem>>, vector<8x32xf32>
    %c0_1 = arith.constant 0 : index
    %c0_2 = arith.constant 0 : index
    %1 = vector.load %arg2[%c0_1, %c0_2] : memref<32x128xf32, #tpu.memory_space<vmem>>, vector<32x128xf32>
    %cst = arith.constant dense<0.000000e+00> : vector<8x128xf32>
    %2 = tpu.matmul %0, %1, %cst {dimension_numbers = #tpu.dot_dimension_numbers<[1], [0], [0], [1], [0, 0, 1, 1], [], []>} : vector<8x32xf32>, vector<32x128xf32>, vector<8x128xf32> -> vector<8x128xf32>
    %c0_3 = arith.constant 0 : index
    %c0_4 = arith.constant 0 : index
    %3 = vector.load %arg1[%c0_3, %c0_4] : memref<8x16xf32, #tpu.memory_space<vmem>>, vector<8x16xf32>
    %c0_5 = arith.constant 0 : index
    %c0_6 = arith.constant 0 : index
    %4 = vector.load %arg3[%c0_5, %c0_6] : memref<16x128xf32, #tpu.memory_space<vmem>>, vector<16x128xf32>
    %cst_7 = arith.constant dense<0.000000e+00> : vector<8x128xf32>
    %5 = tpu.matmul %3, %4, %cst_7 {dimension_numbers = #tpu.dot_dimension_numbers<[1], [0], [0], [1], [0, 0, 1, 1], [], []>} : vector<8x16xf32>, vector<16x128xf32>, vector<8x128xf32> -> vector<8x128xf32>
    %6 = arith.addf %2, %5 : vector<8x128xf32>
    %c0_8 = arith.constant 0 : index
    %c0_9 = arith.constant 0 : index
    %7 = vector.load %arg4[%c0_8, %c0_9] : memref<1x128xf32, #tpu.memory_space<vmem>>, vector<1x128xf32>
    %8 = vector.broadcast %7 : vector<1x128xf32> to vector<8x128xf32>
    %9 = arith.addf %6, %8 : vector<8x128xf32>
    %c0_10 = arith.constant 0 : index
    %c0_11 = arith.constant 0 : index
    %10 = vector.load %arg5[%c0_10, %c0_11] : memref<8x128xf32, #tpu.memory_space<vmem>>, vector<8x128xf32>
    tpu.vector_store %arg5[%c0_10, %c0_11], %9 {strides = array<i32>} : memref<8x128xf32, #tpu.memory_space<vmem>>, vector<8x128xf32>,
    return
  }
}

</mosaic_0001>

<llo_original>
// kernel: tpu_custom_call.1
$region0: #{tpu_custom_call.1}
  #allocation0 [shape = 'u32[]', space=smem, size = 0x4, offset = 0x4, fixed_abs, tag = 'smem constant byte address 0x4 - core index']
  #allocation1 [shape = 'u32[72,128]{1,0:T(1,128)}', space=vmem, size = 0x9000, scoped, tag = 'internal scratch']
  %s0 = inlined_call_operand.hbm [shape: f32[8,32], index: 0, kind: input, shape index: {}]
  %s1 = inlined_call_operand.hbm [shape: f32[8,16], index: 1, kind: input, shape index: {}]
  %s2 = inlined_call_operand.hbm [shape: f32[32,128], index: 2, kind: input, shape index: {}]
  %s3 = inlined_call_operand.hbm [shape: f32[16,128], index: 3, kind: input, shape index: {}]
  %s4 = inlined_call_operand.vmem [shape: f32[1,128], index: 4, kind: input, shape index: {}]
  %s5 = inlined_call_operand.hbm [shape: f32[8,128], index: 5, kind: output, shape index: {}]
  %s6 = sld [smem:[#allocation0]]
  $region46: #{tpu_custom_call.1} parent=0
    _
  %s8 = ssub.s32 1, %s6
  %s9 = scalar_select 0, %s8, %s6
  $region1: #{tpu_custom_call.1} parent=0
    #allocation2 [shape = 'u8[4096]{0}', space=vmem, size = 0x1000, scoped, tag = 'input window, operand 0, single buffered']
    #allocation3 [shape = 's32[1]{0}', space=sflag, size = 0x4, scoped, tag = 'scoped memory for tpu_custom_call.1']
    #allocation4 [shape = 's32[1]{0}', space=sflag, size = 0x4, scoped, tag = 'scoped memory for tpu_custom_call.1']
    #allocation5 [shape = 'u8[4096]{0}', space=vmem, size = 0x1000, scoped, tag = 'input window, operand 1, single buffered']
    #allocation6 [shape = 's32[1]{0}', space=sflag, size = 0x4, scoped, tag = 'scoped memory for tpu_custom_call.1']
    #allocation7 [shape = 'u8[16384]{0}', space=vmem, size = 0x4000, scoped, tag = 'input window, operand 2, single buffered']
    #allocation8 [shape = 'u8[8192]{0}', space=vmem, size = 0x2000, scoped, tag = 'input window, operand 3, single buffered']
    #allocation9 [shape = 's32[1]{0}', space=sflag, size = 0x4, scoped, tag = 'scoped memory for tpu_custom_call.1']
    #allocation10 [shape = 'u8[4096]{0}', space=vmem, size = 0x1000, scoped, tag = 'output window, operand 0, single buffered']
    %10 = vsyncpa [#allocation3], 0
    %11 = vsyncpa [#allocation6], 0
    %12 = vsyncpa [#allocation9], 0
    %13 = vsyncpa [#allocation4], 0
    // Predicated region
    $region2: #{tpu_custom_call.1} parent=1 // pred_check
      _
    $region3: #{tpu_custom_call.1} parent=1 // pred_check_branch
      %15 = sbr.rel (0) target = $region5
    $region4: #{tpu_custom_call.1} parent=1 // pred_region
      %17 = vsyncadd [#allocation3], 0
      %s19 = sshll.u32 %s0, 4
      %s20 = int_to_ptr.hbm [resolvable:$true] %s19
      %s21 = sshll.u32 [#allocation2], 4
      %s22 = int_to_ptr.vmem [resolvable:$true] %s21
      %24 = dma.hbm_to_vmem [thread:$0]  %s20, 128, %s22, [#allocation3]
    $region5: #{tpu_custom_call.1} parent=1 // pred_fallthru
      _
    // Predicated region
    $region6: #{tpu_custom_call.1} parent=1 // pred_check
      _
    $region7: #{tpu_custom_call.1} parent=1 // pred_check_branch
      %26 = sbr.rel (0) target = $region9
    $region8: #{tpu_custom_call.1} parent=1 // pred_region
      %28 = vsyncadd [#allocation6], 0
      %s30 = sshll.u32 %s1, 4
      %s31 = int_to_ptr.hbm [resolvable:$true] %s30
      %s32 = sshll.u32 [#allocation5], 4
      %s33 = int_to_ptr.vmem [resolvable:$true] %s32
      %35 = dma.hbm_to_vmem [thread:$0]  %s31, 128, %s33, [#allocation6]
    $region9: #{tpu_custom_call.1} parent=1 // pred_fallthru
      _
    // Predicated region
    $region10: #{tpu_custom_call.1} parent=1 // pred_check
      _
    $region11: #{tpu_custom_call.1} parent=1 // pred_check_branch
      %37 = sbr.rel (0) target = $region13
    $region12: #{tpu_custom_call.1} parent=1 // pred_region
      %39 = vsyncadd [#allocation6], 0
      %s40 = sshll.u32 %s2, 4
      %s41 = int_to_ptr.hbm [resolvable:$true] %s40
      %s42 = sshll.u32 [#allocation7], 4
      %s43 = int_to_ptr.vmem [resolvable:$true] %s42
      %48 = dma.hbm_to_vmem [thread:$0]  %s41, 512, %s43, [#allocation6], 128, 128, 8
    $region13: #{tpu_custom_call.1} parent=1 // pred_fallthru
      _
    // Predicated region
    $region14: #{tpu_custom_call.1} parent=1 // pred_check
      _
    $region15: #{tpu_custom_call.1} parent=1 // pred_check_branch
      %50 = sbr.rel (0) target = $region17
    $region16: #{tpu_custom_call.1} parent=1 // pred_region
      %52 = vsyncadd [#allocation9], 0
      %s53 = sshll.u32 %s3, 4
      %s54 = int_to_ptr.hbm [resolvable:$true] %s53
      %s55 = sshll.u32 [#allocation8], 4
      %s56 = int_to_ptr.vmem [resolvable:$true] %s55
      %61 = dma.hbm_to_vmem [thread:$0]  %s54, 256, %s56, [#allocation9], 128, 128, 8
    $region17: #{tpu_custom_call.1} parent=1 // pred_fallthru
      _
    // Predicated region
    $region18: #{tpu_custom_call.1} parent=1 // pred_check
      _
    $region19: #{tpu_custom_call.1} parent=1 // pred_check_branch
      %63 = sbr.rel (0) target = $region21
    $region20: #{tpu_custom_call.1} parent=1 // pred_region
      _
    $region21: #{tpu_custom_call.1} parent=1 // pred_fallthru
      _
    // Predicated region
    $region22: #{tpu_custom_call.1} parent=1 // pred_check
      _
    $region23: #{tpu_custom_call.1} parent=1 // pred_check_branch
      %65 = sbr.rel (0) target = $region25
    $region24: #{tpu_custom_call.1} parent=1 // pred_region
      %67 = dma.done [#allocation3], 128
    $region25: #{tpu_custom_call.1} parent=1 // pred_fallthru
      _
    // Predicated region
    $region26: #{tpu_custom_call.1} parent=1 // pred_check
      _
    $region27: #{tpu_custom_call.1} parent=1 // pred_check_branch
      %69 = sbr.rel (0) target = $region29
    $region28: #{tpu_custom_call.1} parent=1 // pred_region
      %71 = dma.done [#allocation6], 128
    $region29: #{tpu_custom_call.1} parent=1 // pred_fallthru
      _
    // Predicated region
    $region30: #{tpu_custom_call.1} parent=1 // pred_check
      _
    $region31: #{tpu_custom_call.1} parent=1 // pred_check_branch
      %73 = sbr.rel (0) target = $region33
    $region32: #{tpu_custom_call.1} parent=1 // pred_region
      %75 = dma.done [#allocation6], 512
    $region33: #{tpu_custom_call.1} parent=1 // pred_fallthru
      _
    // Predicated region
    $region34: #{tpu_custom_call.1} parent=1 // pred_check
      _
    $region35: #{tpu_custom_call.1} parent=1 // pred_check_branch
      %77 = sbr.rel (0) target = $region37
    $region36: #{tpu_custom_call.1} parent=1 // pred_region
      %79 = dma.done [#allocation9], 256
    $region37: #{tpu_custom_call.1} parent=1 // pred_fallthru
      _
    %v80 = vld [vmem:[#allocation2] sm:$0xff]
    %v81 = vld [vmem:[#allocation7] sm:$0xff]
    %v82 = vld [vmem:[#allocation7 + $0x8] sm:$0xff]
    %v83 = vld [vmem:[#allocation7 + $0x10] sm:$0xff]
    %v84 = vld [vmem:[#allocation7 + $0x18] sm:$0xff]
    %v85 = vld [vmem:[#allocation5] sm:$0xff]
    %v86 = vld [vmem:[#allocation8] sm:$0xff]
    %v87 = vld [vmem:[#allocation8 + $0x8] sm:$0xff]
    %vm88 = vcmask 130048
    %v90 = vsel %vm88, %v85, 0
    %92 = vmatpush.msra.mxu0 0.0
    %93 = vmatpush.msra.mxu0 0.0
    %94 = vmatpush.msra.mxu0 0.0
    %95 = vmatpush.msra.mxu0 0.0
    %96 = vmatpush.msra.mxu0 0.0
    %97 = vmatpush.msra.mxu0 0.0
    %98 = vmatpush.msra.mxu0 0.0
    %99 = vmatpush.msra.mxu0 0.0
    %100 = vmatpush.msra.mxu0 0.0
    %101 = vmatpush.msra.mxu0 0.0
    %102 = vmatpush.msra.mxu0 0.0
    %103 = vmatpush.msra.mxu0 0.0
    %104 = vmatpush.msra.mxu0 0.0
    %105 = vmatpush.msra.mxu0 0.0
    %106 = vmatpush.msra.mxu0 %v87
    %107 = vmatpush.msra.mxu0 %v86
    %108 = vmatmul.f32.gmra.mxu0 %v90
    %v109 = vpop.f32.mrf.mxu0
    %v110 = vadd.f32 0.0, %v109
    %111 = vdwg.mxu0
    %vm112 = vcmask 261120
    %v114 = vsel %vm112, %v80, 0
    %116 = vmatpush.msra.mxu0 0.0
    %117 = vmatpush.msra.mxu0 0.0
    %118 = vmatpush.msra.mxu0 0.0
    %119 = vmatpush.msra.mxu0 0.0
    %120 = vmatpush.msra.mxu0 0.0
    %121 = vmatpush.msra.mxu0 0.0
    %122 = vmatpush.msra.mxu0 0.0
    %123 = vmatpush.msra.mxu0 0.0
    %124 = vmatpush.msra.mxu0 0.0
    %125 = vmatpush.msra.mxu0 0.0
    %126 = vmatpush.msra.mxu0 0.0
    %127 = vmatpush.msra.mxu0 0.0
    %128 = vmatpush.msra.mxu0 %v84
    %129 = vmatpush.msra.mxu0 %v83
    %130 = vmatpush.msra.mxu0 %v82
    %131 = vmatpush.msra.mxu0 %v81
    %132 = vmatmul.f32.gmra.mxu0 %v114
    %v133 = vpop.f32.mrf.mxu0
    %v134 = vadd.f32 %v110, %v133
    %135 = vdwg.mxu0
    %v136 = vld [vmem:[%s4] sm:$0x1]
    %v138 = vperm.slane %v136, 0
    %v140 = vadd.f32 %v134, %v138
    %141 = vst [vmem:[#allocation10] sm:$0xff] %v140
    // Predicated region
    $region38: #{tpu_custom_call.1} parent=1 // pred_check
      _
    $region39: #{tpu_custom_call.1} parent=1 // pred_check_branch
      %143 = sbr.rel (0) target = $region41
    $region40: #{tpu_custom_call.1} parent=1 // pred_region
      %145 = vsyncadd [#allocation4], 0
      %s147 = sshll.u32 [#allocation10], 4
      %s148 = int_to_ptr.vmem [resolvable:$true] %s147
      %s149 = sshll.u32 %s5, 4
      %s150 = int_to_ptr.hbm [resolvable:$true] %s149
      %152 = dma.vmem_to_hbm [thread:$0]  %s148, 128, %s150, [#allocation4]
    $region41: #{tpu_custom_call.1} parent=1 // pred_fallthru
      _
    // Predicated region
    $region42: #{tpu_custom_call.1} parent=1 // pred_check
      _
    $region43: #{tpu_custom_call.1} parent=1 // pred_check_branch
      %154 = sbr.rel (0) target = $region45
    $region44: #{tpu_custom_call.1} parent=1 // pred_region
      %156 = dma.done [#allocation4], 128
    $region45: #{tpu_custom_call.1} parent=1 // pred_fallthru
      _
    %157 = vsyncpa [#allocation3], 1
    %158 = vsyncpa [#allocation6], 1
    %159 = vsyncpa [#allocation9], 1
    %160 = vsyncpa [#allocation4], 1

</llo_original>
